<compile_context>
chip_gen: v5e
topology: v5e:2x2
jax: 0.10.0
libtpu: 0.0.40
codegen_flags: <defaults>
</compile_context>

<pallas_src>
import math

import jax
import jax.numpy as jnp
from jax.experimental import pallas as pl
from jax.experimental.pallas import tpu as pltpu


def _round_up(x, m):
    return (x + m - 1) // m * m


def _make_mlp_kernel(chunks, matmul_dtype, approximate_gelu):
    """chunks: static tuple of (start, size) over the padded intermediate dim."""
    inv_sqrt2 = 1.0 / math.sqrt(2.0)

    def kernel(x_ref, w1_ref, b1_ref, w2_ref, b2_ref, o_ref, acc_ref):
        # x_ref:   (tm, H)  row tile of hidden_states, original dtype (e.g. f32)
        # w1_ref:  (H, Ip)  fc1 weight (in, out), matmul dtype, VMEM-resident
        # b1_ref:  (1, Ip)  fc1 bias, f32
        # w2_ref:  (Ip, H)  fc2 weight (in, out), matmul dtype, VMEM-resident
        # b2_ref:  (1, H)   fc2 bias, f32
        # o_ref:   (tm, H)  output row tile (original dtype)
        # acc_ref: (tm, H)  f32 accumulator scratch
        x = x_ref[...].astype(matmul_dtype)   # in-kernel cast (VPU, hidden under MXU)
        acc_ref[...] = jnp.zeros_like(acc_ref)

        # Statically unrolled loop over 128-aligned chunks of the intermediate
        # dim: chunk k+1's fc1 matmul (MXU) is independent of chunk k's GELU
        # (VALU/EUP), so the scheduler can overlap them.
        for c0, csz in chunks:
            h = jnp.dot(x, w1_ref[:, c0:c0 + csz],
                        preferred_element_type=jnp.float32)
            h = h + b1_ref[:, c0:c0 + csz]
            if approximate_gelu:
                # tanh-form GELU: transcendental runs on the (otherwise idle) EUP.
                g = jax.nn.gelu(h, approximate=True)
            else:
                # Exact erf-form GELU (torch.nn.functional.gelu default).
                g = 0.5 * h * (1.0 + jax.lax.erf(h * inv_sqrt2))
            acc_ref[...] += jnp.dot(g.astype(matmul_dtype),
                                    w2_ref[c0:c0 + csz, :],
                                    preferred_element_type=jnp.float32)

        o_ref[...] = (acc_ref[...] + b2_ref[...]).astype(o_ref.dtype)

    return kernel


def prepare_siglip_mlp_params(w1, b1, w2, b2, *, matmul_dtype=jnp.bfloat16):
    """One-time (model-load) weight prep.

    Pads the intermediate dim to a multiple of 128 (mathematically exact:
    gelu(0) = 0 and the padded rows of w2 are zero) and casts the weights to the
    matmul dtype once, so the per-call path pays no extra HBM convert passes.
    """
    H, I = w1.shape
    Ip = _round_up(I, 128)
    if Ip != I:
        w1 = jnp.pad(w1, ((0, 0), (0, Ip - I)))
        b1 = jnp.pad(b1, (0, Ip - I))
        w2 = jnp.pad(w2, ((0, Ip - I), (0, 0)))
    w1p = w1.astype(matmul_dtype)
    w2p = w2.astype(matmul_dtype)
    b1p = b1.reshape(1, Ip).astype(jnp.float32)
    b2p = b2.reshape(1, H).astype(jnp.float32)
    return w1p, b1p, w2p, b2p


def siglip_mlp(hidden_states, w1, b1, w2, b2, *, tm=256, ti=512,
               matmul_dtype=jnp.bfloat16, approximate_gelu=False,
               prepared=False):
    """hidden_states: (B, S, H). w1: (H, I), b1: (I,), w2: (I, H), b2: (H,).

    If `prepared=True`, (w1, b1, w2, b2) must come from
    prepare_siglip_mlp_params (padded + cast once at model-load time).
    """
    B, S, H = hidden_states.shape
    if not prepared:
        w1, b1, w2, b2 = prepare_siglip_mlp_params(
            w1, b1, w2, b2, matmul_dtype=matmul_dtype)
    mm_dtype = w1.dtype
    Ip = w1.shape[1]
    M = B * S
    in_dtype = hidden_states.dtype
    out_dtype = in_dtype

    # Row tile: large (MXU-friendly) by default; clamp for tiny inputs and split
    # a single-step grid in two so both v7x TensorCores get work.
    tm = min(tm, M)
    if tm >= M and M >= 16 and M % 16 == 0:
        tm = M // 2
    grid_m = pl.cdiv(M, tm)

    # Intermediate-dim chunking (static, 128-aligned chunk boundaries).
    ti = _round_up(min(ti, Ip), 128)
    chunks = []
    c0 = 0
    while c0 < Ip:
        csz = min(ti, Ip - c0)
        chunks.append((c0, csz))
        c0 += csz
    chunks = tuple(chunks)
    max_chunk = max(c for _, c in chunks)

    x2d = hidden_states.reshape(M, H)   # no wrapper-side dtype cast (done in-kernel)

    # VMEM budget: resident weights (single-buffered), double-buffered
    # activation/output tiles, f32 accumulator + per-chunk intermediates,
    # ~20% headroom — clamped to the actual device VMEM (valid on v7x 64 MiB).
    msize = jnp.dtype(mm_dtype).itemsize
    xsize = jnp.dtype(in_dtype).itemsize
    osize = jnp.dtype(out_dtype).itemsize
    need = (2 * H * Ip * msize                  # w1 + w2 resident (single buffer)
            + (Ip + H) * 4 * 8                  # biases (sublane-padded)
            + 2 * tm * H * xsize                # double-buffered input tile
            + 2 * tm * H * osize                # double-buffered output tile
            + tm * H * 4                        # f32 accumulator scratch
            + 3 * tm * max_chunk * 4)           # live per-chunk f32 intermediates
    try:
        device_vmem = int(pltpu.get_tpu_info().vmem_capacity_bytes)
    except Exception:
        device_vmem = 64 << 20                  # conservative fallback (v7x per-TC)
    vmem_cap = int(device_vmem * 0.85)
    vmem_limit = min(max(int(need * 1.2), 16 << 20), vmem_cap)
    # TODO(synk): for fp8 weight quantization on v7x (halved resident VMEM,
    # ~2x MXU), apply per-channel scales after the f32 accumulate.

    cost = pl.CostEstimate(
        flops=4 * M * H * Ip,                   # two matmuls: 2*M*H*Ip each
        transcendentals=M * Ip,                 # one erf/tanh per fc1 output
        bytes_accessed=(M * H * (xsize + osize)          # read x + write out
                        + 2 * H * Ip * msize             # weights
                        + (Ip + H) * 4),                 # biases
    )

    kernel = _make_mlp_kernel(chunks, mm_dtype, approximate_gelu)

    out = pl.pallas_call(
        kernel,
        out_shape=jax.ShapeDtypeStruct((M, H), out_dtype),
        grid_spec=pltpu.PrefetchScalarGridSpec(
            num_scalar_prefetch=0,
            grid=(grid_m,),
            in_specs=[
                # Activation row tile: pipelined (default double buffer).
                pl.BlockSpec((tm, H), lambda i: (i, 0)),
                # Weights / biases: constant index_map -> VMEM-resident,
                # single-buffered.
                pl.BlockSpec((H, Ip), lambda i: (0, 0), pipeline_mode=pl.Buffered(1)),
                pl.BlockSpec((1, Ip), lambda i: (0, 0), pipeline_mode=pl.Buffered(1)),
                pl.BlockSpec((Ip, H), lambda i: (0, 0), pipeline_mode=pl.Buffered(1)),
                pl.BlockSpec((1, H), lambda i: (0, 0), pipeline_mode=pl.Buffered(1)),
            ],
            out_specs=pl.BlockSpec((tm, H), lambda i: (i, 0)),
            scratch_shapes=[pltpu.VMEM((tm, H), jnp.float32)],
        ),
        compiler_params=pltpu.CompilerParams(
            dimension_semantics=("parallel",),  # rows shard across TCs on v7x
            vmem_limit_bytes=vmem_limit,
        ),
        cost_estimate=cost,
    )(x2d, w1, b1, w2, b2)

    return out.reshape(B, S, H)


def reference_mlp(hidden_states, w1, b1, w2, b2):
    h = jnp.dot(hidden_states, w1) + b1
    g = jax.nn.gelu(h, approximate=False)
    return jnp.dot(g, w2) + b2


if __name__ == "__main__":
    key = jax.random.PRNGKey(0)

    def make_inputs(k, B, S, H, I):
        kx, kw1, kb1, kw2, kb2 = jax.random.split(k, 5)
        x = jax.random.normal(kx, (B, S, H), dtype=jnp.float32)
        w1 = jax.random.normal(kw1, (H, I), dtype=jnp.float32) * (1.0 / math.sqrt(H))
        b1 = jax.random.normal(kb1, (I,), dtype=jnp.float32) * 0.01
        w2 = jax.random.normal(kw2, (I, H), dtype=jnp.float32) * (1.0 / math.sqrt(I))
        b2 = jax.random.normal(kb2, (H,), dtype=jnp.float32) * 0.01
        return x, w1, b1, w2, b2

    k1, k2 = jax.random.split(key)

    # Config 1: SiglipMLP with hidden=32, intermediate=64, batch=2, seq=8
    # (intermediate padded 64 -> 128, single I-chunk).
    x, w1, b1, w2, b2 = make_inputs(k1, 2, 8, 32, 64)
    ref = reference_mlp(x, w1, b1, w2, b2)

    # 1) f32 matmul path: tight parity with the reference.
    out_f32 = jax.block_until_ready(
        siglip_mlp(x, w1, b1, w2, b2, matmul_dtype=jnp.float32))
    assert out_f32.shape == x.shape
    assert jnp.allclose(out_f32, ref, atol=1e-5, rtol=1e-5), (
        f"f32 path max abs err {jnp.max(jnp.abs(out_f32 - ref))}")

    # 2) bf16 fast path with one-time prepared (model-load-style) weights.
    w1p, b1p, w2p, b2p = prepare_siglip_mlp_params(w1, b1, w2, b2)
    out_bf16 = jax.block_until_ready(
        siglip_mlp(x, w1p, b1p, w2p, b2p, prepared=True))
    assert out_bf16.shape == x.shape
    assert jnp.allclose(out_bf16, ref, atol=5e-2, rtol=5e-2), (
        f"bf16 path max abs err {jnp.max(jnp.abs(out_bf16 - ref))}")

    # 3) Multi-chunk intermediate dim: intermediate=320 with ti=128 exercises
    #    the in-kernel chunk loop (3 chunks of 128 after padding 320 -> 384).
    x2, w1_2, b1_2, w2_2, b2_2 = make_inputs(k2, 2, 8, 32, 320)
    ref2 = reference_mlp(x2, w1_2, b1_2, w2_2, b2_2)
    out2 = jax.block_until_ready(
        siglip_mlp(x2, w1_2, b1_2, w2_2, b2_2, ti=128, matmul_dtype=jnp.float32))
    assert jnp.allclose(out2, ref2, atol=1e-5, rtol=1e-5), (
        f"chunked f32 path max abs err {jnp.max(jnp.abs(out2 - ref2))}")

    print("KERNEL_OK")
</pallas_src>

<mosaic_0001>
module attributes {stable_mosaic.version = 11 : i64} {
  func.func @kernel(%arg0: i32, %arg1: memref<8x32xf32, #tpu.memory_space<vmem>>, %arg2: memref<32x128xf32, #tpu.memory_space<vmem>>, %arg3: memref<1x128xf32, #tpu.memory_space<vmem>>, %arg4: memref<128x32xf32, #tpu.memory_space<vmem>>, %arg5: memref<1x32xf32, #tpu.memory_space<vmem>>, %arg6: memref<8x32xf32, #tpu.memory_space<vmem>>, %arg7: memref<8x32xf32, #tpu.memory_space<vmem>>) attributes {dimension_semantics = [#tpu.dimension_semantics<parallel>], iteration_bounds = array<i64: 2>, scalar_prefetch = 0 : i64, scratch_operands = 1 : i64, tpu.core_type = #tpu.core_type<tc>, window_params = [{transform_indices = @transform_0, window_bounds = array<i64: 8, 32>}, {pipeline_mode = #tpu.pipeline_mode<synchronous>, transform_indices = @transform_1, window_bounds = array<i64: 32, 128>}, {pipeline_mode = #tpu.pipeline_mode<synchronous>, transform_indices = @transform_2, window_bounds = array<i64: 1, 128>}, {pipeline_mode = #tpu.pipeline_mode<synchronous>, transform_indices = @transform_3, window_bounds = array<i64: 128, 32>}, {pipeline_mode = #tpu.pipeline_mode<synchronous>, transform_indices = @transform_4, window_bounds = array<i64: 1, 32>}, {transform_indices = @transform_5, window_bounds = array<i64: 8, 32>}]} {
    %c0 = arith.constant 0 : index
    %c0_0 = arith.constant 0 : index
    %0 = vector.load %arg1[%c0, %c0_0] : memref<8x32xf32, #tpu.memory_space<vmem>>, vector<8x32xf32>
    %cst = arith.constant 0.000000e+00 : f32
    %1 = vector.broadcast %cst : f32 to vector<8x32xf32>
    %c0_1 = arith.constant 0 : index
    %c0_2 = arith.constant 0 : index
    %2 = vector.load %arg7[%c0_1, %c0_2] : memref<8x32xf32, #tpu.memory_space<vmem>>, vector<8x32xf32>
    tpu.vector_store %arg7[%c0_1, %c0_2], %1 {strides = array<i32>} : memref<8x32xf32, #tpu.memory_space<vmem>>, vector<8x32xf32>,
    %c0_3 = arith.constant 0 : index
    %c0_4 = arith.constant 0 : index
    %3 = vector.load %arg2[%c0_3, %c0_4] : memref<32x128xf32, #tpu.memory_space<vmem>>, vector<32x128xf32>
    %cst_5 = arith.constant dense<0.000000e+00> : vector<8x128xf32>
    %4 = tpu.matmul %0, %3, %cst_5 {dimension_numbers = #tpu.dot_dimension_numbers<[1], [0], [0], [1], [0, 0, 1, 1], [], []>} : vector<8x32xf32>, vector<32x128xf32>, vector<8x128xf32> -> vector<8x128xf32>
    %c0_6 = arith.constant 0 : index
    %c0_7 = arith.constant 0 : index
    %5 = vector.load %arg3[%c0_6, %c0_7] : memref<1x128xf32, #tpu.memory_space<vmem>>, vector<1x128xf32>
    %6 = vector.broadcast %5 : vector<1x128xf32> to vector<8x128xf32>
    %7 = arith.addf %4, %6 : vector<8x128xf32>
    %cst_8 = arith.constant 5.000000e-01 : f32
    %8 = vector.broadcast %cst_8 : f32 to vector<8x128xf32>
    %9 = arith.mulf %8, %7 : vector<8x128xf32>
    %cst_9 = arith.constant 0.707106769 : f32
    %10 = vector.broadcast %cst_9 : f32 to vector<8x128xf32>
    %11 = arith.mulf %7, %10 : vector<8x128xf32>
    %12 = math.erf %11 : vector<8x128xf32>
    %cst_10 = arith.constant 1.000000e+00 : f32
    %13 = vector.broadcast %cst_10 : f32 to vector<8x128xf32>
    %14 = arith.addf %13, %12 : vector<8x128xf32>
    %15 = arith.mulf %9, %14 : vector<8x128xf32>
    %c0_11 = arith.constant 0 : index
    %c0_12 = arith.constant 0 : index
    %16 = vector.load %arg7[%c0_11, %c0_12] : memref<8x32xf32, #tpu.memory_space<vmem>>, vector<8x32xf32>
    %c0_13 = arith.constant 0 : index
    %c0_14 = arith.constant 0 : index
    %17 = vector.load %arg4[%c0_13, %c0_14] : memref<128x32xf32, #tpu.memory_space<vmem>>, vector<128x32xf32>
    %cst_15 = arith.constant dense<0.000000e+00> : vector<8x32xf32>
    %18 = tpu.matmul %15, %17, %cst_15 {dimension_numbers = #tpu.dot_dimension_numbers<[1], [0], [0], [1], [0, 0, 1, 1], [], []>} : vector<8x128xf32>, vector<128x32xf32>, vector<8x32xf32> -> vector<8x32xf32>
    %19 = arith.addf %16, %18 : vector<8x32xf32>
    %c0_16 = arith.constant 0 : index
    %c0_17 = arith.constant 0 : index
    %20 = vector.load %arg7[%c0_16, %c0_17] : memref<8x32xf32, #tpu.memory_space<vmem>>, vector<8x32xf32>
    tpu.vector_store %arg7[%c0_16, %c0_17], %19 {strides = array<i32>} : memref<8x32xf32, #tpu.memory_space<vmem>>, vector<8x32xf32>,
    %c0_18 = arith.constant 0 : index
    %c0_19 = arith.constant 0 : index
    %21 = vector.load %arg7[%c0_18, %c0_19] : memref<8x32xf32, #tpu.memory_space<vmem>>, vector<8x32xf32>
    %c0_20 = arith.constant 0 : index
    %c0_21 = arith.constant 0 : index
    %22 = vector.load %arg5[%c0_20, %c0_21] : memref<1x32xf32, #tpu.memory_space<vmem>>, vector<1x32xf32>
    %23 = vector.broadcast %22 : vector<1x32xf32> to vector<8x32xf32>
    %24 = arith.addf %21, %23 : vector<8x32xf32>
    %c0_22 = arith.constant 0 : index
    %c0_23 = arith.constant 0 : index
    %25 = vector.load %arg6[%c0_22, %c0_23] : memref<8x32xf32, #tpu.memory_space<vmem>>, vector<8x32xf32>
    tpu.vector_store %arg6[%c0_22, %c0_23], %24 {strides = array<i32>} : memref<8x32xf32, #tpu.memory_space<vmem>>, vector<8x32xf32>,
    return
  }
  func.func @transform_0(%arg0: i32) -> (i32, i32) {
    %c0_i32 = arith.constant 0 : i32
    %c0_i32_0 = arith.constant 0 : i32
    return %arg0, %c0_i32 : i32, i32
  }
  func.func @transform_1(%arg0: i32) -> (i32, i32) {
    %c0_i32 = arith.constant 0 : i32
    %c0_i32_0 = arith.constant 0 : i32
    %c0_i32_1 = arith.constant 0 : i32
    return %c0_i32, %c0_i32_0 : i32, i32
  }
  func.func @transform_2(%arg0: i32) -> (i32, i32) {
    %c0_i32 = arith.constant 0 : i32
    %c0_i32_0 = arith.constant 0 : i32
    %c0_i32_1 = arith.constant 0 : i32
    return %c0_i32, %c0_i32_0 : i32, i32
  }
  func.func @transform_3(%arg0: i32) -> (i32, i32) {
    %c0_i32 = arith.constant 0 : i32
    %c0_i32_0 = arith.constant 0 : i32
    %c0_i32_1 = arith.constant 0 : i32
    return %c0_i32, %c0_i32_0 : i32, i32
  }
  func.func @transform_4(%arg0: i32) -> (i32, i32) {
    %c0_i32 = arith.constant 0 : i32
    %c0_i32_0 = arith.constant 0 : i32
    %c0_i32_1 = arith.constant 0 : i32
    return %c0_i32, %c0_i32_0 : i32, i32
  }
  func.func @transform_5(%arg0: i32) -> (i32, i32) {
    %c0_i32 = arith.constant 0 : i32
    %c0_i32_0 = arith.constant 0 : i32
    return %arg0, %c0_i32 : i32, i32
  }
}

</mosaic_0001>

<llo_original>
// kernel: tpu_custom_call.1
$region0: #{tpu_custom_call.1}
  #allocation0 [shape = 'u32[]', space=smem, size = 0x4, offset = 0x4, fixed_abs, tag = 'smem constant byte address 0x4 - core index']
  #allocation1 [shape = 'u32[72,128]{1,0:T(1,128)}', space=vmem, size = 0x9000, scoped, tag = 'internal scratch']
  #allocation2 [shape = 'f32[8,32]{1,0:T(8,128)}', space=vmem, size = 0x1000, scoped, tag = 'scratch operand']
  %s0 = inlined_call_operand.vmem [shape: f32[16,32], index: 0, kind: input, shape index: {}]
  %s1 = inlined_call_operand.vmem [shape: f32[32,128], index: 1, kind: input, shape index: {}]
  %s2 = inlined_call_operand.vmem [shape: f32[1,128], index: 2, kind: input, shape index: {}]
  %s3 = inlined_call_operand.vmem [shape: f32[128,32], index: 3, kind: input, shape index: {}]
  %s4 = inlined_call_operand.vmem [shape: f32[1,32], index: 4, kind: input, shape index: {}]
  %s5 = inlined_call_operand.hbm [shape: f32[16,32], index: 5, kind: output, shape index: {}]
  %s6 = sld [smem:[#allocation0]]
  $region53: #{tpu_custom_call.1} parent=0
    _
  %s8 = ssub.s32 1, %s6
  %s9 = scalar_select 0, %s8, %s6
  $region1: #{tpu_custom_call.1} parent=0
    #allocation3 [shape = 'u8[8192]{0}', space=vmem, size = 0x2000, scoped, tag = 'output window, operand 0']
    #allocation4 [shape = 's32[2]{0}', space=sflag, size = 0x8, scoped, tag = 'scoped memory for tpu_custom_call.1']
    %10 = vsyncpa [#allocation4], 0
    %s11 = scalar_lea.sflag [#allocation4], 1
    %12 = vsyncpa %s11, 0
    loop: start=0, step=1, limit=4
    $region2: #{tpu_custom_call.1} parent=1 // loop_pre_header
      _
    $region3: #{tpu_custom_call.1} parent=1 // loop_header
      %s14 = sphi 0, %s18
      %p15 = scmp.ge.s32.totalorder %s14, 4
      %s24 = sphi 0, %s26
      %s27 = sphi 0, %s24
      %s28 = sphi 0, %s27
      %s44 = sphi 0, %s28
      %s48 = sphi 0, %s48
      %s50 = sphi 0, %s48
      %s51 = sphi 0, %s50
      %s65 = sphi 0, %s51
      %s69 = sphi 0, %s69
      %s71 = sphi 0, %s69
      %s72 = sphi 0, %s71
      %s86 = sphi 0, %s72
      %s90 = sphi 0, %s90
      %s92 = sphi 0, %s90
      %s93 = sphi 0, %s92
      %s107 = sphi 0, %s93
      %s111 = sphi 0, %s111
      %s113 = sphi 0, %s111
      %s114 = sphi 0, %s113
      %s128 = sphi 0, %s114
      %s134 = sphi 0, %s136
      %s137 = sphi 0, %s134
      %s138 = sphi 0, %s137
      %s154 = sphi 0, %s138
    $region4: #{tpu_custom_call.1} parent=1 // loop_header_branch
      %17 = sbr.rel (%p15) target = $region8
    $region5: #{tpu_custom_call.1} parent=1 // loop_body
      %s19 = ssub.s32 %s14, 1
      %s20 = ssub.s32 %s14, 2
      %s21 = sadd.s32 %s14, 1
      %s22 = ssub.s32 %s14, %s21
      %p23 = scmp.eq.s32.totalorder %s22, 0
      %s25 = sadd.s32 %s24, 1
      %s26 = scalar_select %p23, %s24, %s25
      %p29 = pneg %p23
      %p30 = scmp.eq.s32.totalorder %s14, 1
      %p31 = por %p29, %p30
      %p32 = scmp.ne.s32.totalorder %s24, %s27
      %p33 = scmp.eq.s32.totalorder %s14, 0
      %p34 = por %p32, %p33
      %p35 = scmp.ne.s32.totalorder %s24, %s27
      %p36 = scmp.eq.s32.totalorder %s19, 1
      %p37 = por %p35, %p36
      %p38 = scmp.ne.s32.totalorder %s27, %s28
      %p39 = scmp.eq.s32.totalorder %s19, 0
      %p40 = por %p38, %p39
      %p41 = scmp.ne.s32.totalorder %s27, %s28
      %p42 = scmp.eq.s32.totalorder %s20, 1
      %p43 = por %p41, %p42
      %p45 = scmp.ne.s32.totalorder %s28, %s44
      %p46 = scmp.eq.s32.totalorder %s20, 0
      %p47 = por %p45, %p46
      %s49 = sadd.s32 %s48, 1
      %p52 = scmp.eq.s32.totalorder %s14, 1
      %p53 = scmp.ne.s32.totalorder %s48, %s50
      %p54 = scmp.eq.s32.totalorder %s14, 0
      %p55 = por %p53, %p54
      %p56 = scmp.ne.s32.totalorder %s48, %s50
      %p57 = scmp.eq.s32.totalorder %s19, 1
      %p58 = por %p56, %p57
      %p59 = scmp.ne.s32.totalorder %s50, %s51
      %p60 = scmp.eq.s32.totalorder %s19, 0
      %p61 = por %p59, %p60
      %p62 = scmp.ne.s32.totalorder %s50, %s51
      %p63 = scmp.eq.s32.totalorder %s20, 1
      %p64 = por %p62, %p63
      %p66 = scmp.ne.s32.totalorder %s51, %s65
      %p67 = scmp.eq.s32.totalorder %s20, 0
      %p68 = por %p66, %p67
      %s70 = sadd.s32 %s69, 1
      %p73 = scmp.eq.s32.totalorder %s14, 1
      %p74 = scmp.ne.s32.totalorder %s69, %s71
      %p75 = scmp.eq.s32.totalorder %s14, 0
      %p76 = por %p74, %p75
      %p77 = scmp.ne.s32.totalorder %s69, %s71
      %p78 = scmp.eq.s32.totalorder %s19, 1
      %p79 = por %p77, %p78
      %p80 = scmp.ne.s32.totalorder %s71, %s72
      %p81 = scmp.eq.s32.totalorder %s19, 0
      %p82 = por %p80, %p81
      %p83 = scmp.ne.s32.totalorder %s71, %s72
      %p84 = scmp.eq.s32.totalorder %s20, 1
      %p85 = por %p83, %p84
      %p87 = scmp.ne.s32.totalorder %s72, %s86
      %p88 = scmp.eq.s32.totalorder %s20, 0
      %p89 = por %p87, %p88
      %s91 = sadd.s32 %s90, 1
      %p94 = scmp.eq.s32.totalorder %s14, 1
      %p95 = scmp.ne.s32.totalorder %s90, %s92
      %p96 = scmp.eq.s32.totalorder %s14, 0
      %p97 = por %p95, %p96
      %p98 = scmp.ne.s32.totalorder %s90, %s92
      %p99 = scmp.eq.s32.totalorder %s19, 1
      %p100 = por %p98, %p99
      %p101 = scmp.ne.s32.totalorder %s92, %s93
      %p102 = scmp.eq.s32.totalorder %s19, 0
      %p103 = por %p101, %p102
      %p104 = scmp.ne.s32.totalorder %s92, %s93
      %p105 = scmp.eq.s32.totalorder %s20, 1
      %p106 = por %p104, %p105
      %p108 = scmp.ne.s32.totalorder %s93, %s107
      %p109 = scmp.eq.s32.totalorder %s20, 0
      %p110 = por %p108, %p109
      %s112 = sadd.s32 %s111, 1
      %p115 = scmp.eq.s32.totalorder %s14, 1
      %p116 = scmp.ne.s32.totalorder %s111, %s113
      %p117 = scmp.eq.s32.totalorder %s14, 0
      %p118 = por %p116, %p117
      %p119 = scmp.ne.s32.totalorder %s111, %s113
      %p120 = scmp.eq.s32.totalorder %s19, 1
      %p121 = por %p119, %p120
      %p122 = scmp.ne.s32.totalorder %s113, %s114
      %p123 = scmp.eq.s32.totalorder %s19, 0
      %p124 = por %p122, %p123
      %p125 = scmp.ne.s32.totalorder %s113, %s114
      %p126 = scmp.eq.s32.totalorder %s20, 1
      %p127 = por %p125, %p126
      %p129 = scmp.ne.s32.totalorder %s114, %s128
      %p130 = scmp.eq.s32.totalorder %s20, 0
      %p131 = por %p129, %p130
      %s132 = ssub.s32 %s14, %s21
      %p133 = scmp.eq.s32.totalorder %s132, 0
      %s135 = sadd.s32 %s134, 1
      %s136 = scalar_select %p133, %s134, %s135
      %p139 = pneg %p133
      %p140 = scmp.eq.s32.totalorder %s14, 1
      %p141 = por %p139, %p140
      %p142 = scmp.ne.s32.totalorder %s134, %s137
      %p143 = scmp.eq.s32.totalorder %s14, 0
      %p144 = por %p142, %p143
      %p145 = scmp.ne.s32.totalorder %s134, %s137
      %p146 = scmp.eq.s32.totalorder %s19, 1
      %p147 = por %p145, %p146
      %p148 = scmp.ne.s32.totalorder %s137, %s138
      %p149 = scmp.eq.s32.totalorder %s19, 0
      %p150 = por %p148, %p149
      %p151 = scmp.ne.s32.totalorder %s137, %s138
      %p152 = scmp.eq.s32.totalorder %s20, 1
      %p153 = por %p151, %p152
      %p155 = scmp.ne.s32.totalorder %s138, %s154
      %p156 = scmp.eq.s32.totalorder %s20, 0
      %p157 = por %p155, %p156
      %p158 = scmp.le.s32.totalorder 1, %s14
      %p159 = scmp.lt.s32.totalorder %s14, 3
      %p160 = pnand %p158, %p159
      %p161 = pneg %p160
      // Predicated region
      $region9: #{tpu_custom_call.1} parent=5 // pred_check
        _
      $region10: #{tpu_custom_call.1} parent=5 // pred_check_branch
        %163 = sbr.rel (%p160) target = $region12
      $region11: #{tpu_custom_call.1} parent=5 // pred_region
        %s164 = ssub.s32 %s14, 1
        // Predicated region
        $region13: #{tpu_custom_call.1} parent=11 // pred_check
          %p165 = pneg %p61
        $region14: #{tpu_custom_call.1} parent=11 // pred_check_branch
          %167 = sbr.rel (%p165) target = $region16
        $region15: #{tpu_custom_call.1} parent=11 // pred_region
          _
        $region16: #{tpu_custom_call.1} parent=11 // pred_fallthru
          _
        // Predicated region
        $region17: #{tpu_custom_call.1} parent=11 // pred_check
          %p168 = pneg %p82
        $region18: #{tpu_custom_call.1} parent=11 // pred_check_branch
          %170 = sbr.rel (%p168) target = $region20
        $region19: #{tpu_custom_call.1} parent=11 // pred_region
          _
        $region20: #{tpu_custom_call.1} parent=11 // pred_fallthru
          _
        // Predicated region
        $region21: #{tpu_custom_call.1} parent=11 // pred_check
          %p171 = pneg %p103
        $region22: #{tpu_custom_call.1} parent=11 // pred_check_branch
          %173 = sbr.rel (%p171) target = $region24
        $region23: #{tpu_custom_call.1} parent=11 // pred_region
          _
        $region24: #{tpu_custom_call.1} parent=11 // pred_fallthru
          _
        // Predicated region
        $region25: #{tpu_custom_call.1} parent=11 // pred_check
          %p174 = pneg %p124
        $region26: #{tpu_custom_call.1} parent=11 // pred_check_branch
          %176 = sbr.rel (%p174) target = $region28
        $region27: #{tpu_custom_call.1} parent=11 // pred_region
          _
        $region28: #{tpu_custom_call.1} parent=11 // pred_fallthru
          _
      $region12: #{tpu_custom_call.1} parent=5 // pred_fallthru
        _
      %p177 = scmp.lt.s32.totalorder %s14, 2
      // Predicated region
      $region29: #{tpu_custom_call.1} parent=5 // pred_check
        %p178 = pneg %p177
      $region30: #{tpu_custom_call.1} parent=5 // pred_check_branch
        %180 = sbr.rel (%p178) target = $region32
      $region31: #{tpu_custom_call.1} parent=5 // pred_region
        // Predicated region
        $region33: #{tpu_custom_call.1} parent=31 // pred_check
          %p181 = pneg %p34
        $region34: #{tpu_custom_call.1} parent=31 // pred_check_branch
          %183 = sbr.rel (%p181) target = $region36
        $region35: #{tpu_custom_call.1} parent=31 // pred_region
          %p184 = scmp.lt.s32.totalorder %s14, 1
          %s185 = scalar_select %p184, %s14, 1
          %s186 = smul.addr %s185, 8
          %s187 = scalar_lea.vmem %s0, %s186
        $region36: #{tpu_custom_call.1} parent=31 // pred_fallthru
          _
      $region32: #{tpu_custom_call.1} parent=5 // pred_fallthru
        _
      %p188 = scmp.le.s32.totalorder 1, %s14
      %p189 = scmp.lt.s32.totalorder %s14, 3
      %p190 = pnand %p188, %p189
      %p191 = pneg %p190
      // Predicated region
      $region37: #{tpu_custom_call.1} parent=5 // pred_check
        _
      $region38: #{tpu_custom_call.1} parent=5 // pred_check_branch
        %193 = sbr.rel (%p190) target = $region40
      $region39: #{tpu_custom_call.1} parent=5 // pred_region
        %s194 = ssub.s32 %s14, 1
        %p195 = scmp.lt.s32.totalorder %s19, 1
        %s196 = scalar_select %p195, %s19, 1
        %s197 = smul.addr %s196, 8
        %s198 = scalar_lea.vmem %s0, %s197
        %p199 = pneg %p40
        %p200 = pneg %p37
        %p201 = pneg %p61
        %p202 = pneg %p58
        %p203 = pneg %p82
        %p204 = pneg %p79
        %p205 = pneg %p103
        %p206 = pneg %p100
        %p207 = pneg %p124
        %p208 = pneg %p121
        %p209 = pneg %p150
        %p210 = pneg %p147
        %s211 = sand.u32 %s137, 1
        %s212 = scalar_lea.sflag [#allocation4], %s211
        %s213 = sand.u32 %s137, 1
        %s214 = smul.addr %s213, 8
        %s215 = scalar_lea.vmem [#allocation3], %s214
        %p216 = scmp.lt.s32.totalorder %s19, 1
        %s217 = scalar_select %p216, %s19, 1
        %s218 = smul.addr %s217, 8
        %s219 = scalar_lea.vmem %s0, %s218
        %v220 = vld [vmem:[%s219] sm:$0xff]
        %vm221 = vcmask 261120
        %222 = vst.msk [vmem:[#allocation2] sm:$0xff] %vm221, 0.0
        %v223 = vld [vmem:[%s1] sm:$0xff]
        %v224 = vld [vmem:[%s1 + $0x8] sm:$0xff]
        %v225 = vld [vmem:[%s1 + $0x10] sm:$0xff]
        %v226 = vld [vmem:[%s1 + $0x18] sm:$0xff]
        %v227 = vld [vmem:[%s2] sm:$0x1]
        %v229 = vperm.slane %v227, 0
        %v232 = vsel %vm221, %v220, 0
        %234 = vmatpush.msra.mxu0 0.0
        %235 = vmatpush.msra.mxu0 0.0
        %236 = vmatpush.msra.mxu0 0.0
        %237 = vmatpush.msra.mxu0 0.0
        %238 = vmatpush.msra.mxu0 0.0
        %239 = vmatpush.msra.mxu0 0.0
        %240 = vmatpush.msra.mxu0 0.0
        %241 = vmatpush.msra.mxu0 0.0
        %242 = vmatpush.msra.mxu0 0.0
        %243 = vmatpush.msra.mxu0 0.0
        %244 = vmatpush.msra.mxu0 0.0
        %245 = vmatpush.msra.mxu0 0.0
        %246 = vmatpush.msra.mxu0 %v226
        %247 = vmatpush.msra.mxu0 %v225
        %248 = vmatpush.msra.mxu0 %v224
        %249 = vmatpush.msra.mxu0 %v223
        %250 = vmatmul.f32.gmra.mxu0 %v232
        %v251 = vpop.f32.mrf.mxu0
        %v252 = vadd.f32 %v229, %v251
        %253 = vdwg.mxu0
        %v254 = vmul.f32 %v252, 0.5
        %v255 = vmul.f32 %v252, 0.70710677
        %v256 = vmul.f32 %v255, %v255
        %v257 = vmin.f32 16.0, %v256
        %v258 = vmul.f32 %v257, 2.1237322e-06
        %v259 = vadd.f32 %v258, 0.00028619796
        %v260 = vmul.f32 %v257, %v259
        %v261 = vadd.f32 %v260, 0.0036580483
        %v262 = vmul.f32 %v257, %v261
        %v263 = vadd.f32 %v262, 0.05243302
        %v264 = vmul.f32 %v257, %v263
        %v265 = vadd.f32 %v264, 0.18741608
        %v266 = vmul.f32 %v257, %v265
        %v267 = vadd.f32 %v266, 1.1283791
        %v268 = vmul.f32 %v255, %v267
        %v269 = vmul.f32 %v257, 3.8918573e-05
        %v270 = vadd.f32 %v269, 0.001143296
        %v271 = vmul.f32 %v257, %v270
        %v272 = vadd.f32 %v271, 0.014752088
        %v273 = vmul.f32 %v257, %v272
        %v274 = vadd.f32 %v273, 0.112945676
        %v275 = vmul.f32 %v257, %v274
        %v276 = vadd.f32 %v275, 0.4994258
        %v277 = vmul.f32 %v257, %v276
        %v278 = vadd.f32 %v277, 1.0
        %v279 = vrcp.pop %v278
        %v280 = vmul.f32 %v278, %v279
        %v281 = vsub.f32 1.0, %v280
        %v282 = vmul.f32 %v279, %v281
        %v283 = vadd.f32 %v279, %v282
        %vm284 = vweird.f32 %v278
        %vm285 = vweird.f32 %v279
        %vm286 = vmor %vm284, %vm285
        %v287 = vsel %vm286, %v279, %v283
        %v288 = vand.u32 2147483647, %v278
        %vm289 = vcmp.eq.f32.partialorder %v288, 8.507059e+37
        %v290 = vand.u32 %v278, 2147483648
        %v291 = vor.u32 1.1754944e-38, %v290
        %v292 = vsel %vm289, %v291, %v287
        %v293 = vmul.f32 %v268, %v292
        %v294 = vmin.f32 %v293, 1.0
        %v295 = vmax.f32 %v294, -1.0
        %v296 = vadd.f32 %v295, 1.0
        %v297 = vmul.f32 %v254, %v296
        %v298 = vld [vmem:[#allocation2] sm:$0xff]
        %v299 = vld [vmem:[%s3] sm:$0xff]
        %v300 = vld [vmem:[%s3 + $0x8] sm:$0xff]
        %v301 = vld [vmem:[%s3 + $0x10] sm:$0xff]
        %v302 = vld [vmem:[%s3 + $0x18] sm:$0xff]
        %v303 = vld [vmem:[%s3 + $0x20] sm:$0xff]
        %v304 = vld [vmem:[%s3 + $0x28] sm:$0xff]
        %v305 = vld [vmem:[%s3 + $0x30] sm:$0xff]
        %v306 = vld [vmem:[%s3 + $0x38] sm:$0xff]
        %v307 = vld [vmem:[%s3 + $0x40] sm:$0xff]
        %v308 = vld [vmem:[%s3 + $0x48] sm:$0xff]
        %v309 = vld [vmem:[%s3 + $0x50] sm:$0xff]
        %v310 = vld [vmem:[%s3 + $0x58] sm:$0xff]
        %v311 = vld [vmem:[%s3 + $0x60] sm:$0xff]
        %v312 = vld [vmem:[%s3 + $0x68] sm:$0xff]
        %v313 = vld [vmem:[%s3 + $0x70] sm:$0xff]
        %v314 = vld [vmem:[%s3 + $0x78] sm:$0xff]
        %315 = vmatpush.msra.mxu0 %v314
        %316 = vmatpush.msra.mxu0 %v313
        %317 = vmatpush.msra.mxu0 %v312
        %318 = vmatpush.msra.mxu0 %v311
        %319 = vmatpush.msra.mxu0 %v310
        %320 = vmatpush.msra.mxu0 %v309
        %321 = vmatpush.msra.mxu0 %v308
        %322 = vmatpush.msra.mxu0 %v307
        %323 = vmatpush.msra.mxu0 %v306
        %324 = vmatpush.msra.mxu0 %v305
        %325 = vmatpush.msra.mxu0 %v304
        %326 = vmatpush.msra.mxu0 %v303
        %327 = vmatpush.msra.mxu0 %v302
        %328 = vmatpush.msra.mxu0 %v301
        %329 = vmatpush.msra.mxu0 %v300
        %330 = vmatpush.msra.mxu0 %v299
        %331 = vmatmul.f32.gmra.mxu0 %v297
        %v332 = vpop.f32.mrf.mxu0
        %v333 = vadd.f32 0.0, %v332
        %334 = vdwg.mxu0
        %v335 = vadd.f32 %v298, %v333
        %336 = vst.msk [vmem:[#allocation2] sm:$0xff] %vm221, %v335
        %v337 = vld [vmem:[#allocation2] sm:$0xff]
        %v338 = vld [vmem:[%s4] sm:$0x1]
        %v340 = vperm.slane %v338, 0
        %v342 = vadd.f32 %v337, %v340
        %343 = vst.msk [vmem:[%s215] sm:$0xff] %vm221, %v342
        %s344 = sand.u32 %s137, 1
        %s345 = scalar_lea.sflag [#allocation4], %s344
        %s346 = sand.u32 %s137, 1
        %s347 = smul.addr %s346, 8
        %s348 = scalar_lea.vmem [#allocation3], %s347
        // Predicated region
        $region41: #{tpu_custom_call.1} parent=39 // pred_check
          %p349 = pneg %p147
        $region42: #{tpu_custom_call.1} parent=39 // pred_check_branch
          %351 = sbr.rel (%p349) target = $region44
        $region43: #{tpu_custom_call.1} parent=39 // pred_region
          %353 = vsyncadd %s345, 0
          %s354 = smul.addr %s19, 8
          %s355 = scalar_lea.hbm %s5, %s354
          %s357 = sshll.u32 %s348, 4
          %s358 = int_to_ptr.vmem [resolvable:$true] %s357
          %s359 = sshll.u32 %s355, 4
          %s360 = int_to_ptr.hbm [resolvable:$true] %s359
          %362 = dma.vmem_to_hbm [thread:$0]  %s358, 128, %s360, %s345
        $region44: #{tpu_custom_call.1} parent=39 // pred_fallthru
          _
      $region40: #{tpu_custom_call.1} parent=5 // pred_fallthru
        _
      %p363 = scmp.le.s32.totalorder 2, %s14
      // Predicated region
      $region45: #{tpu_custom_call.1} parent=5 // pred_check
        %p364 = pneg %p363
      $region46: #{tpu_custom_call.1} parent=5 // pred_check_branch
        %366 = sbr.rel (%p364) target = $region48
      $region47: #{tpu_custom_call.1} parent=5 // pred_region
        %s367 = ssub.s32 %s14, 2
        // Predicated region
        $region49: #{tpu_custom_call.1} parent=47 // pred_check
          %p368 = pneg %p153
        $region50: #{tpu_custom_call.1} parent=47 // pred_check_branch
          %370 = sbr.rel (%p368) target = $region52
        $region51: #{tpu_custom_call.1} parent=47 // pred_region
          %s371 = sand.u32 %s138, 1
          %s372 = scalar_lea.sflag [#allocation4], %s371
          %s373 = sand.u32 %s138, 1
          %s374 = smul.addr %s373, 8
          %s375 = scalar_lea.vmem [#allocation3], %s374
          %377 = dma.done %s372, 128
        $region52: #{tpu_custom_call.1} parent=47 // pred_fallthru
          _
      $region48: #{tpu_custom_call.1} parent=5 // pred_fallthru
        _
    $region6: #{tpu_custom_call.1} parent=1 // loop_footer
      %s18 = sadd.s32 1, %s14
    $region7: #{tpu_custom_call.1} parent=1 // loop_footer_branch
      %13 = sbr.rel target = $region3
    $region8: #{tpu_custom_call.1} parent=1 // loop_exit
      _
    %378 = vsyncpa [#allocation4], 1
    %s379 = scalar_lea.sflag [#allocation4], 1
    %380 = vsyncpa %s379, 1

</llo_original>
